<compile_context>
chip_gen: v6e
topology: v6e:2x2x1
jax: 0.10.0
libtpu: 0.0.40
codegen_flags: <defaults>
</compile_context>

<pallas_src>
import math

import jax
import jax.numpy as jnp
from jax.experimental import pallas as pl
from jax.experimental.pallas import tpu as pltpu


def _downsample_kernel(pe_ref, po_ref, w_ref, b_ref, o_ref):
    """One (batch, row-tile, cout-tile) grid step of the strided 3x3 conv.

    pe_ref: (1, TH+1, Wj, 3C)  even padded rows r*TH .. r*TH+TH (kh = 0 / 2);
                               channel axis folds the kw = 0/1/2 column taps.
    po_ref: (1, TH,   Wj, 3C)  odd padded rows r*TH .. r*TH+TH-1 (kh = 1).
    w_ref : (3, 3C, TC)        folded weight: one (3C, TC) matrix per kh.
    b_ref : (1, TC)            bias (f32).
    o_ref : (1, TH, Wj, TC)    output rows of this tile (cols >= Wo are junk).
    """
    th, wj, tc = o_ref.shape[1], o_ref.shape[2], o_ref.shape[3]
    k = pe_ref.shape[3]                              # 3 * C_in
    m = th * wj                                      # MXU M dim for the tile

    # Per-tap LHS slabs; Wj is a multiple of 8 so the reshapes are free.
    e0 = pe_ref[0, pl.ds(0, th)].reshape(m, k)       # x_pad rows 2*ho     (kh=0)
    e2 = pe_ref[0, pl.ds(1, th)].reshape(m, k)       # x_pad rows 2*ho + 2 (kh=2)
    od = po_ref[0].reshape(m, k)                     # x_pad rows 2*ho + 1 (kh=1)

    # Three accumulating MXU matmuls (K = 3C), f32 accumulation.
    acc = jnp.dot(e0, w_ref[0], preferred_element_type=jnp.float32)
    acc = acc + jnp.dot(od, w_ref[1], preferred_element_type=jnp.float32)
    acc = acc + jnp.dot(e2, w_ref[2], preferred_element_type=jnp.float32)
    acc = acc + b_ref[...]                           # single bias broadcast/tile

    o_ref[0] = acc.reshape(th, wj, tc).astype(o_ref.dtype)


def _vmem_capacity_bytes(default=64 << 20):
    """Physical VMEM of the current TPU generation (falls back to the smallest,
    v7x-sized, value).  This is only a capability probe for tile sizing; it
    never guards the pallas_call / kernel compilation itself."""
    get_info = getattr(pltpu, "get_tpu_info", None)
    if get_info is None:
        return default
    try:
        cap = getattr(get_info(), "vmem_capacity_bytes", None)
    except Exception:  # hardware-info query unavailable on this runtime
        return default
    return int(cap) if cap else default


def _pick_tiles(ho, wj, c, in_b, out_b, vmem_cap):
    """Pick the output-row tile TH and the Cout tile TC from the generation's
    VMEM capacity (bigger tiles on v5e/v6e's 128 MiB, conservative on v7x)."""
    budget = min(vmem_cap // 3, 40 << 20)            # double-buffered working set
    max_th = 64 if vmem_cap >= (100 << 20) else 32

    # Cout tile: keep the double-buffered weight block comfortably small.
    weight_budget = min(vmem_cap // 8, 8 << 20)
    tc = c
    while tc % 256 == 0 and 2 * (3 * 3 * c) * tc * in_b > weight_budget:
        tc //= 2                                     # stays a lane-aligned divisor of C

    # Per-output-row bytes: pipelined blocks (x2 buffers) + in-kernel temporaries.
    row_db = 2 * (2 * wj * 3 * c * in_b + wj * tc * out_b)
    row_tmp = wj * tc * 4 + 2 * wj * 3 * c * in_b + wj * tc * out_b
    const = 2 * (3 * 3 * c * tc * in_b + 4 * tc) + 2 * wj * 3 * c * in_b
    avail = max(budget - const, row_db + row_tmp)
    th_cap = int(max(1, min(ho, max_th, avail // (row_db + row_tmp))))

    # Prefer a tile that divides Ho (no wasted tail rows) unless that costs
    # more than half of the achievable tile size.
    div = max((d for d in range(1, th_cap + 1) if ho % d == 0), default=1)
    th = div if 2 * div >= th_cap else th_cap
    return th, tc


def downsample_forward(x_nchw, weight, bias, *, compute_dtype=jnp.bfloat16):
    """Forward of DownSample: Conv2d(C, C, kernel_size=3, stride=2, padding=1).

    x_nchw : (N, C, H, W)  input (output keeps this dtype, NCHW layout)
    weight : (C, C, 3, 3)  PyTorch-layout conv weight (Cout, Cin, kh, kw)
    bias   : (C,)
    """
    N, C, H, W = x_nchw.shape
    Ho, Wo = (H + 1) // 2, (W + 1) // 2
    out_dtype = x_nchw.dtype
    in_b = jnp.dtype(compute_dtype).itemsize
    out_b = jnp.dtype(out_dtype).itemsize

    Wj = -(-(Wo + 1) // 8) * 8                       # out-col count, padded to mult. of 8
    vmem_cap = _vmem_capacity_bytes()
    TH, TC = _pick_tiles(Ho, Wj, C, in_b, out_b, vmem_cap)
    R = -(-Ho // TH)                                 # row tiles
    CO = C // TC                                     # cout tiles

    Hp = 2 * R * TH + 2                              # padded image rows
    Wp = 2 * Wj + 2                                  # padded image cols

    # ---- layout pass (fused by XLA): NCHW -> NHWC bf16, zero-pad, fold the
    # three kw column taps onto the channel axis, split row parities. --------
    x = jnp.transpose(x_nchw, (0, 2, 3, 1)).astype(compute_dtype)
    x_pad = jnp.pad(x, ((0, 0), (1, Hp - 1 - H), (1, Wp - 1 - W), (0, 0)))
    xe = x_pad.reshape(N, Hp, Wp // 2, 2, C)
    #   cols[n, i, j, g*C:(g+1)*C] = x_pad[n, i, 2j + g, :]   for g in {0, 1, 2}
    cols = jnp.concatenate(
        [xe[:, :, :Wj, 0, :], xe[:, :, :Wj, 1, :], xe[:, :, 1:Wj + 1, 0, :]],
        axis=-1)                                               # (N, Hp, Wj, 3C)
    po = cols[:, 1:2 * R * TH:2]                               # odd rows  (N, R*TH,   Wj, 3C)
    ev = cols[:, 0::2]                                         # even rows (N, R*TH+1, Wj, 3C)
    if R == 1:
        pe = ev                                                # (N, TH+1, Wj, 3C)
    else:
        # Duplicate each tile's boundary row so every row-tile block carries
        # the TH+1 even rows it needs (rows r*TH .. r*TH+TH).
        rows = (jnp.arange(R)[:, None] * TH
                + jnp.arange(TH + 1)[None, :]).reshape(-1)
        pe = jnp.take(ev, rows, axis=1)                        # (N, R*(TH+1), Wj, 3C)

    # PyTorch weight (Cout, Cin, 3, 3) -> (kh, kw*Cin, Cout); bias as f32 row.
    wf = jnp.transpose(weight, (2, 3, 1, 0)).reshape(3, 3 * C, C).astype(compute_dtype)
    bf = bias.astype(jnp.float32).reshape(1, C)

    M = TH * Wj
    cost = pl.CostEstimate(
        flops=2 * 3 * N * R * CO * M * (3 * C) * TC,
        transcendentals=0,
        bytes_accessed=int(N * R * (2 * TH + 1) * Wj * 3 * C * in_b
                           + N * R * CO * (3 * 3 * C * TC * in_b + 4 * TC)
                           + N * R * TH * Wj * C * out_b),
    )

    pe_blk = (TH + 1) * Wj * 3 * C * in_b
    po_blk = TH * Wj * 3 * C * in_b
    w_blk = 3 * 3 * C * TC * in_b
    o_blk = TH * Wj * TC * out_b
    est_vmem = (2 * (pe_blk + po_blk + w_blk + 4 * TC + o_blk)  # pipelined blocks (x2 buffers)
                + M * TC * 4                                    # f32 accumulator
                + 2 * M * 3 * C * in_b                          # staged matmul LHS values
                + o_blk)                                        # store / cast staging
    # Always pass a scoped-VMEM limit (fixes v5e's 16 MiB default) and keep it
    # well under the physical capacity (v7x: 64 MiB).
    vmem_limit = int(min(vmem_cap - (8 << 20), max(2 * est_vmem, 32 << 20)))

    out = pl.pallas_call(
        _downsample_kernel,
        out_shape=jax.ShapeDtypeStruct((N, R * TH, Wj, C), out_dtype),
        grid_spec=pltpu.PrefetchScalarGridSpec(
            num_scalar_prefetch=0,
            grid=(N, R, CO),
            in_specs=[
                pl.BlockSpec((1, TH + 1, Wj, 3 * C), lambda n, r, co: (n, r, 0, 0)),
                pl.BlockSpec((1, TH, Wj, 3 * C), lambda n, r, co: (n, r, 0, 0)),
                pl.BlockSpec((3, 3 * C, TC), lambda n, r, co: (0, 0, co)),
                pl.BlockSpec((1, TC), lambda n, r, co: (0, co)),
            ],
            out_specs=pl.BlockSpec((1, TH, Wj, TC), lambda n, r, co: (n, r, 0, co)),
        ),
        compiler_params=pltpu.CompilerParams(
            dimension_semantics=("parallel", "parallel", "parallel"),
            vmem_limit_bytes=vmem_limit),
        cost_estimate=cost,
    )(pe, po, wf, bf)

    # Drop the padded tail rows / junk columns and return NCHW (module boundary).
    # TODO(synk): for small C (< ~64) the op is HBM-bound and the parity-fold
    # relayout above adds input traffic; a pl.ANY + manual-DMA path reading
    # x_pad directly would be cheaper in that regime.
    out = out[:, :Ho, :Wo, :]
    return jnp.transpose(out, (0, 3, 1, 2))


def init_downsample_params(key, in_channels):
    """Deterministic xavier_uniform_ weight + zero bias (matches initialize())."""
    fan = in_channels * 3 * 3
    bound = math.sqrt(6.0 / (fan + fan))
    weight = jax.random.uniform(
        key, (in_channels, in_channels, 3, 3),
        minval=-bound, maxval=bound, dtype=jnp.float32)
    bias = jnp.zeros((in_channels,), dtype=jnp.float32)
    return weight, bias


if __name__ == "__main__":
    key = jax.random.PRNGKey(0)
    k_x, k_w, k_b = jax.random.split(key, 3)

    N, C, H, W = 2, 4, 16, 16
    x = jax.random.normal(k_x, (N, C, H, W), dtype=jnp.float32)
    weight, bias = init_downsample_params(k_w, C)
    # Non-zero bias so the bias path is actually exercised.
    bias = 0.1 * jax.random.normal(k_b, (C,), dtype=jnp.float32)

    out = downsample_forward(x, weight, bias)
    out = jax.block_until_ready(out)
    assert out.shape == (N, C, H // 2, W // 2), out.shape

    # Reference: XLA conv on the same bf16-quantized inputs with f32 math, so
    # the comparison is tight despite the bf16 MXU path inside the kernel.
    xq = x.astype(jnp.bfloat16).astype(jnp.float32)
    wq = weight.astype(jnp.bfloat16).astype(jnp.float32)
    ref = jax.lax.conv_general_dilated(
        xq, wq, window_strides=(2, 2), padding=((1, 1), (1, 1)),
        dimension_numbers=("NCHW", "OIHW", "NCHW"),
        precision=jax.lax.Precision.HIGHEST) + bias.reshape(1, C, 1, 1)
    max_err = float(jnp.max(jnp.abs(out - ref)))
    assert jnp.allclose(out, ref, atol=1e-4, rtol=1e-4), max_err

    print("KERNEL_OK")
</pallas_src>

<mosaic_0001>
module attributes {stable_mosaic.version = 11 : i64} {
  func.func @_downsample_kernel(%arg0: i32, %arg1: i32, %arg2: i32, %arg3: memref<1x9x16x12xbf16, #tpu.memory_space<vmem>>, %arg4: memref<1x8x16x12xbf16, #tpu.memory_space<vmem>>, %arg5: memref<3x12x4xbf16, #tpu.memory_space<vmem>>, %arg6: memref<1x4xf32, #tpu.memory_space<vmem>>, %arg7: memref<1x8x16x4xf32, #tpu.memory_space<vmem>>) attributes {dimension_semantics = [#tpu.dimension_semantics<parallel>, #tpu.dimension_semantics<parallel>, #tpu.dimension_semantics<parallel>], iteration_bounds = array<i64: 2, 1, 1>, scalar_prefetch = 0 : i64, scratch_operands = 0 : i64, tpu.core_type = #tpu.core_type<tc>, window_params = [{transform_indices = @transform_0, window_bounds = array<i64: 1, 9, 16, 12>}, {transform_indices = @transform_1, window_bounds = array<i64: 1, 8, 16, 12>}, {transform_indices = @transform_2, window_bounds = array<i64: 3, 12, 4>}, {transform_indices = @transform_3, window_bounds = array<i64: 1, 4>}, {transform_indices = @transform_4, window_bounds = array<i64: 1, 8, 16, 4>}]} {
    %c0 = arith.constant 0 : index
    %c0_0 = arith.constant 0 : index
    %c0_1 = arith.constant 0 : index
    %c0_2 = arith.constant 0 : index
    %0 = vector.load %arg3[%c0, %c0_0, %c0_1, %c0_2] : memref<1x9x16x12xbf16, #tpu.memory_space<vmem>>, vector<1x8x16x12xbf16>
    %1 = vector.shape_cast %0 : vector<1x8x16x12xbf16> to vector<8x16x12xbf16>
    %2 = vector.shape_cast %1 : vector<8x16x12xbf16> to vector<128x12xbf16>
    %c0_3 = arith.constant 0 : index
    %c1 = arith.constant 1 : index
    %c0_4 = arith.constant 0 : index
    %c0_5 = arith.constant 0 : index
    %3 = vector.load %arg3[%c0_3, %c1, %c0_4, %c0_5] : memref<1x9x16x12xbf16, #tpu.memory_space<vmem>>, vector<1x8x16x12xbf16>
    %4 = vector.shape_cast %3 : vector<1x8x16x12xbf16> to vector<8x16x12xbf16>
    %5 = vector.shape_cast %4 : vector<8x16x12xbf16> to vector<128x12xbf16>
    %c0_6 = arith.constant 0 : index
    %c0_7 = arith.constant 0 : index
    %c0_8 = arith.constant 0 : index
    %c0_9 = arith.constant 0 : index
    %6 = vector.load %arg4[%c0_6, %c0_7, %c0_8, %c0_9] : memref<1x8x16x12xbf16, #tpu.memory_space<vmem>>, vector<1x8x16x12xbf16>
    %7 = vector.shape_cast %6 : vector<1x8x16x12xbf16> to vector<8x16x12xbf16>
    %8 = vector.shape_cast %7 : vector<8x16x12xbf16> to vector<128x12xbf16>
    %c0_10 = arith.constant 0 : index
    %c0_11 = arith.constant 0 : index
    %c0_12 = arith.constant 0 : index
    %9 = vector.load %arg5[%c0_10, %c0_11, %c0_12] : memref<3x12x4xbf16, #tpu.memory_space<vmem>>, vector<1x12x4xbf16>
    %10 = vector.shape_cast %9 : vector<1x12x4xbf16> to vector<12x4xbf16>
    %cst = arith.constant dense<0.000000e+00> : vector<128x4xf32>
    %11 = tpu.matmul %2, %10, %cst {dimension_numbers = #tpu.dot_dimension_numbers<[1], [0], [0], [1], [0, 0, 1, 1], [], []>} : vector<128x12xbf16>, vector<12x4xbf16>, vector<128x4xf32> -> vector<128x4xf32>
    %c1_13 = arith.constant 1 : index
    %c0_14 = arith.constant 0 : index
    %c0_15 = arith.constant 0 : index
    %12 = vector.load %arg5[%c1_13, %c0_14, %c0_15] : memref<3x12x4xbf16, #tpu.memory_space<vmem>>, vector<1x12x4xbf16>
    %13 = vector.shape_cast %12 : vector<1x12x4xbf16> to vector<12x4xbf16>
    %cst_16 = arith.constant dense<0.000000e+00> : vector<128x4xf32>
    %14 = tpu.matmul %8, %13, %cst_16 {dimension_numbers = #tpu.dot_dimension_numbers<[1], [0], [0], [1], [0, 0, 1, 1], [], []>} : vector<128x12xbf16>, vector<12x4xbf16>, vector<128x4xf32> -> vector<128x4xf32>
    %15 = arith.addf %11, %14 : vector<128x4xf32>
    %c2 = arith.constant 2 : index
    %c0_17 = arith.constant 0 : index
    %c0_18 = arith.constant 0 : index
    %16 = vector.load %arg5[%c2, %c0_17, %c0_18] : memref<3x12x4xbf16, #tpu.memory_space<vmem>>, vector<1x12x4xbf16>
    %17 = vector.shape_cast %16 : vector<1x12x4xbf16> to vector<12x4xbf16>
    %cst_19 = arith.constant dense<0.000000e+00> : vector<128x4xf32>
    %18 = tpu.matmul %5, %17, %cst_19 {dimension_numbers = #tpu.dot_dimension_numbers<[1], [0], [0], [1], [0, 0, 1, 1], [], []>} : vector<128x12xbf16>, vector<12x4xbf16>, vector<128x4xf32> -> vector<128x4xf32>
    %19 = arith.addf %15, %18 : vector<128x4xf32>
    %c0_20 = arith.constant 0 : index
    %c0_21 = arith.constant 0 : index
    %20 = vector.load %arg6[%c0_20, %c0_21] : memref<1x4xf32, #tpu.memory_space<vmem>>, vector<1x4xf32>
    %21 = vector.broadcast %20 : vector<1x4xf32> to vector<128x4xf32>
    %22 = arith.addf %19, %21 : vector<128x4xf32>
    %23 = vector.shape_cast %22 : vector<128x4xf32> to vector<8x16x4xf32>
    %c0_22 = arith.constant 0 : index
    %c0_23 = arith.constant 0 : index
    %c0_24 = arith.constant 0 : index
    %c0_25 = arith.constant 0 : index
    %24 = vector.load %arg7[%c0_22, %c0_23, %c0_24, %c0_25] : memref<1x8x16x4xf32, #tpu.memory_space<vmem>>, vector<1x8x16x4xf32>
    %25 = vector.shape_cast %24 : vector<1x8x16x4xf32> to vector<8x16x4xf32>
    %26 = vector.shape_cast %23 : vector<8x16x4xf32> to vector<1x8x16x4xf32>
    tpu.vector_store %arg7[%c0_22, %c0_23, %c0_24, %c0_25], %26 {strides = array<i32>} : memref<1x8x16x4xf32, #tpu.memory_space<vmem>>, vector<1x8x16x4xf32>,
    return
  }
  func.func @transform_0(%arg0: i32, %arg1: i32, %arg2: i32) -> (i32, i32, i32, i32) {
    %c0_i32 = arith.constant 0 : i32
    %c0_i32_0 = arith.constant 0 : i32
    %c0_i32_1 = arith.constant 0 : i32
    return %arg0, %arg1, %c0_i32, %c0_i32_0 : i32, i32, i32, i32
  }
  func.func @transform_1(%arg0: i32, %arg1: i32, %arg2: i32) -> (i32, i32, i32, i32) {
    %c0_i32 = arith.constant 0 : i32
    %c0_i32_0 = arith.constant 0 : i32
    %c0_i32_1 = arith.constant 0 : i32
    return %arg0, %arg1, %c0_i32, %c0_i32_0 : i32, i32, i32, i32
  }
  func.func @transform_2(%arg0: i32, %arg1: i32, %arg2: i32) -> (i32, i32, i32) {
    %c0_i32 = arith.constant 0 : i32
    %c0_i32_0 = arith.constant 0 : i32
    %c0_i32_1 = arith.constant 0 : i32
    return %c0_i32, %c0_i32_0, %arg2 : i32, i32, i32
  }
  func.func @transform_3(%arg0: i32, %arg1: i32, %arg2: i32) -> (i32, i32) {
    %c0_i32 = arith.constant 0 : i32
    %c0_i32_0 = arith.constant 0 : i32
    return %c0_i32, %arg2 : i32, i32
  }
  func.func @transform_4(%arg0: i32, %arg1: i32, %arg2: i32) -> (i32, i32, i32, i32) {
    %c0_i32 = arith.constant 0 : i32
    %c0_i32_0 = arith.constant 0 : i32
    return %arg0, %arg1, %c0_i32, %arg2 : i32, i32, i32, i32
  }
}

</mosaic_0001>

<llo_original>
// kernel: tpu_custom_call.1
$region0: #{tpu_custom_call.1}
  #allocation0 [shape = 'u32[]', space=smem, size = 0x4, offset = 0x4, fixed_abs, tag = 'smem constant byte address 0x4 - core index']
  #allocation1 [shape = 'u32[144,128]{1,0:T(1,128)}', space=vmem, size = 0x12000, scoped, tag = 'internal scratch']
  %s0 = inlined_call_operand.vmem [shape: bf16[2,9,16,12], index: 0, kind: input, shape index: {}]
  %s1 = inlined_call_operand.vmem [shape: bf16[2,8,16,12], index: 1, kind: input, shape index: {}]
  %s2 = inlined_call_operand.vmem [shape: bf16[3,12,4], index: 2, kind: input, shape index: {}]
  %s3 = inlined_call_operand.vmem [shape: f32[1,4], index: 3, kind: input, shape index: {}]
  %s4 = inlined_call_operand.vmem [shape: f32[2,8,16,4], index: 4, kind: output, shape index: {}]
  %s5 = sld [smem:[#allocation0]]
  $region49: #{tpu_custom_call.1} parent=0
    _
  %s7 = ssub.s32 1, %s5
  %s8 = scalar_select 0, %s7, %s5
  loop: start=0, step=1, limit=4
  $region2: #{tpu_custom_call.1} parent=0 // loop_pre_header
    _
  $region3: #{tpu_custom_call.1} parent=0 // loop_header
    %s10 = sphi 0, %s14
    %p11 = scmp.ge.s32.totalorder %s10, 4
    %s17 = sphi 0, %s36
    %s18 = sphi 0, %s32
    %s19 = sphi 0, %s28
    %s20 = sphi 0, %s17
    %s21 = sphi 0, %s18
    %s22 = sphi 0, %s19
    %s23 = sphi 0, %s20
    %s24 = sphi 0, %s21
    %s25 = sphi 0, %s22
    %s41 = sphi 0, %s43
    %s44 = sphi 0, %s41
    %s45 = sphi 0, %s44
    %s61 = sphi 0, %s45
    %s69 = sphi 0, %s71
    %s72 = sphi 0, %s69
    %s73 = sphi 0, %s72
    %s89 = sphi 0, %s73
    %s95 = sphi 0, %s97
    %s98 = sphi 0, %s95
    %s99 = sphi 0, %s98
    %s115 = sphi 0, %s99
    %s121 = sphi 0, %s123
    %s124 = sphi 0, %s121
    %s125 = sphi 0, %s124
    %s141 = sphi 0, %s125
    %s151 = sphi 0, %s153
    %s154 = sphi 0, %s151
    %s155 = sphi 0, %s154
    %s171 = sphi 0, %s155
  $region4: #{tpu_custom_call.1} parent=0 // loop_header_branch
    %13 = sbr.rel (%p11) target = $region8
  $region5: #{tpu_custom_call.1} parent=0 // loop_body
    %s15 = ssub.s32 %s10, 1
    %s16 = ssub.s32 %s10, 2
    %s26 = sadd.s32 1, %s19
    %p27 = scmp.ge.s32.totalorder %s26, 1
    %s28 = scalar_select %p27, 0, %s26
    %s29 = sadd.s32 1, %s18
    %s30 = scalar_select %p27, %s29, %s18
    %p31 = scmp.ge.s32.totalorder %s30, 1
    %s32 = scalar_select %p31, 0, %s30
    %s33 = sadd.s32 1, %s17
    %s34 = scalar_select %p31, %s33, %s17
    %p35 = scmp.ge.s32.totalorder %s34, 2
    %s36 = scalar_select %p35, 0, %s34
    %s37 = ssub.s32 %s17, %s36
    %s38 = ssub.s32 %s18, %s32
    %s39 = sor.u32 %s37, %s38
    %p40 = scmp.eq.s32.totalorder %s39, 0
    %s42 = sadd.s32 %s41, 1
    %s43 = scalar_select %p40, %s41, %s42
    %p46 = pneg %p40
    %p47 = scmp.eq.s32.totalorder %s10, 1
    %p48 = por %p46, %p47
    %p49 = scmp.ne.s32.totalorder %s41, %s44
    %p50 = scmp.eq.s32.totalorder %s10, 0
    %p51 = por %p49, %p50
    %p52 = scmp.ne.s32.totalorder %s41, %s44
    %p53 = scmp.eq.s32.totalorder %s15, 1
    %p54 = por %p52, %p53
    %p55 = scmp.ne.s32.totalorder %s44, %s45
    %p56 = scmp.eq.s32.totalorder %s15, 0
    %p57 = por %p55, %p56
    %p58 = scmp.ne.s32.totalorder %s44, %s45
    %p59 = scmp.eq.s32.totalorder %s16, 1
    %p60 = por %p58, %p59
    %p62 = scmp.ne.s32.totalorder %s45, %s61
    %p63 = scmp.eq.s32.totalorder %s16, 0
    %p64 = por %p62, %p63
    %s65 = ssub.s32 %s17, %s36
    %s66 = ssub.s32 %s18, %s32
    %s67 = sor.u32 %s65, %s66
    %p68 = scmp.eq.s32.totalorder %s67, 0
    %s70 = sadd.s32 %s69, 1
    %s71 = scalar_select %p68, %s69, %s70
    %p74 = pneg %p68
    %p75 = scmp.eq.s32.totalorder %s10, 1
    %p76 = por %p74, %p75
    %p77 = scmp.ne.s32.totalorder %s69, %s72
    %p78 = scmp.eq.s32.totalorder %s10, 0
    %p79 = por %p77, %p78
    %p80 = scmp.ne.s32.totalorder %s69, %s72
    %p81 = scmp.eq.s32.totalorder %s15, 1
    %p82 = por %p80, %p81
    %p83 = scmp.ne.s32.totalorder %s72, %s73
    %p84 = scmp.eq.s32.totalorder %s15, 0
    %p85 = por %p83, %p84
    %p86 = scmp.ne.s32.totalorder %s72, %s73
    %p87 = scmp.eq.s32.totalorder %s16, 1
    %p88 = por %p86, %p87
    %p90 = scmp.ne.s32.totalorder %s73, %s89
    %p91 = scmp.eq.s32.totalorder %s16, 0
    %p92 = por %p90, %p91
    %s93 = ssub.s32 %s19, %s28
    %p94 = scmp.eq.s32.totalorder %s93, 0
    %s96 = sadd.s32 %s95, 1
    %s97 = scalar_select %p94, %s95, %s96
    %p100 = pneg %p94
    %p101 = scmp.eq.s32.totalorder %s10, 1
    %p102 = por %p100, %p101
    %p103 = scmp.ne.s32.totalorder %s95, %s98
    %p104 = scmp.eq.s32.totalorder %s10, 0
    %p105 = por %p103, %p104
    %p106 = scmp.ne.s32.totalorder %s95, %s98
    %p107 = scmp.eq.s32.totalorder %s15, 1
    %p108 = por %p106, %p107
    %p109 = scmp.ne.s32.totalorder %s98, %s99
    %p110 = scmp.eq.s32.totalorder %s15, 0
    %p111 = por %p109, %p110
    %p112 = scmp.ne.s32.totalorder %s98, %s99
    %p113 = scmp.eq.s32.totalorder %s16, 1
    %p114 = por %p112, %p113
    %p116 = scmp.ne.s32.totalorder %s99, %s115
    %p117 = scmp.eq.s32.totalorder %s16, 0
    %p118 = por %p116, %p117
    %s119 = ssub.s32 %s19, %s28
    %p120 = scmp.eq.s32.totalorder %s119, 0
    %s122 = sadd.s32 %s121, 1
    %s123 = scalar_select %p120, %s121, %s122
    %p126 = pneg %p120
    %p127 = scmp.eq.s32.totalorder %s10, 1
    %p128 = por %p126, %p127
    %p129 = scmp.ne.s32.totalorder %s121, %s124
    %p130 = scmp.eq.s32.totalorder %s10, 0
    %p131 = por %p129, %p130
    %p132 = scmp.ne.s32.totalorder %s121, %s124
    %p133 = scmp.eq.s32.totalorder %s15, 1
    %p134 = por %p132, %p133
    %p135 = scmp.ne.s32.totalorder %s124, %s125
    %p136 = scmp.eq.s32.totalorder %s15, 0
    %p137 = por %p135, %p136
    %p138 = scmp.ne.s32.totalorder %s124, %s125
    %p139 = scmp.eq.s32.totalorder %s16, 1
    %p140 = por %p138, %p139
    %p142 = scmp.ne.s32.totalorder %s125, %s141
    %p143 = scmp.eq.s32.totalorder %s16, 0
    %p144 = por %p142, %p143
    %s145 = ssub.s32 %s17, %s36
    %s146 = ssub.s32 %s18, %s32
    %s147 = sor.u32 %s145, %s146
    %s148 = ssub.s32 %s19, %s28
    %s149 = sor.u32 %s147, %s148
    %p150 = scmp.eq.s32.totalorder %s149, 0
    %s152 = sadd.s32 %s151, 1
    %s153 = scalar_select %p150, %s151, %s152
    %p156 = pneg %p150
    %p157 = scmp.eq.s32.totalorder %s10, 1
    %p158 = por %p156, %p157
    %p159 = scmp.ne.s32.totalorder %s151, %s154
    %p160 = scmp.eq.s32.totalorder %s10, 0
    %p161 = por %p159, %p160
    %p162 = scmp.ne.s32.totalorder %s151, %s154
    %p163 = scmp.eq.s32.totalorder %s15, 1
    %p164 = por %p162, %p163
    %p165 = scmp.ne.s32.totalorder %s154, %s155
    %p166 = scmp.eq.s32.totalorder %s15, 0
    %p167 = por %p165, %p166
    %p168 = scmp.ne.s32.totalorder %s154, %s155
    %p169 = scmp.eq.s32.totalorder %s16, 1
    %p170 = por %p168, %p169
    %p172 = scmp.ne.s32.totalorder %s155, %s171
    %p173 = scmp.eq.s32.totalorder %s16, 0
    %p174 = por %p172, %p173
    %p175 = scmp.le.s32.totalorder 1, %s10
    %p176 = scmp.lt.s32.totalorder %s10, 3
    %p177 = pnand %p175, %p176
    %p178 = pneg %p177
    // Predicated region
    $region9: #{tpu_custom_call.1} parent=5 // pred_check
      _
    $region10: #{tpu_custom_call.1} parent=5 // pred_check_branch
      %180 = sbr.rel (%p177) target = $region12
    $region11: #{tpu_custom_call.1} parent=5 // pred_region
      %s181 = ssub.s32 %s10, 1
      // Predicated region
      $region13: #{tpu_custom_call.1} parent=11 // pred_check
        %p182 = pneg %p111
      $region14: #{tpu_custom_call.1} parent=11 // pred_check_branch
        %184 = sbr.rel (%p182) target = $region16
      $region15: #{tpu_custom_call.1} parent=11 // pred_region
        %p185 = scmp.lt.s32.totalorder %s22, 0
        %s186 = scalar_select %p185, %s22, 0
        %s187 = smul.addr %s186, 4
        %s188 = scalar_lea.vmem %s2, %s187
      $region16: #{tpu_custom_call.1} parent=11 // pred_fallthru
        _
      // Predicated region
      $region17: #{tpu_custom_call.1} parent=11 // pred_check
        %p189 = pneg %p137
      $region18: #{tpu_custom_call.1} parent=11 // pred_check_branch
        %191 = sbr.rel (%p189) target = $region20
      $region19: #{tpu_custom_call.1} parent=11 // pred_region
        %p192 = scmp.lt.s32.totalorder %s22, 0
        %s193 = scalar_select %p192, %s22, 0
        %s194 = scalar_lea.vmem %s3, %s193
      $region20: #{tpu_custom_call.1} parent=11 // pred_fallthru
        _
    $region12: #{tpu_custom_call.1} parent=5 // pred_fallthru
      _
    %p195 = scmp.lt.s32.totalorder %s10, 2
    // Predicated region
    $region21: #{tpu_custom_call.1} parent=5 // pred_check
      %p196 = pneg %p195
    $region22: #{tpu_custom_call.1} parent=5 // pred_check_branch
      %198 = sbr.rel (%p196) target = $region24
    $region23: #{tpu_custom_call.1} parent=5 // pred_region
      // Predicated region
      $region25: #{tpu_custom_call.1} parent=23 // pred_check
        %p199 = pneg %p51
      $region26: #{tpu_custom_call.1} parent=23 // pred_check_branch
        %201 = sbr.rel (%p199) target = $region28
      $region27: #{tpu_custom_call.1} parent=23 // pred_region
        %s202 = smul.u32 9, %s18
        %p203 = scmp.lt.s32.totalorder %s17, 1
        %s204 = scalar_select %p203, %s17, 1
        %p205 = scmp.lt.s32.totalorder %s202, 8
        %s206 = scalar_select %p205, %s202, 8
        %s207 = smul.addr %s206, 2
        %s208 = smul.addr %s204, 18
        %s209 = sadd.s32 %s207, %s208
        %s210 = smul.addr %s209, 4
        %s211 = scalar_lea.vmem %s0, %s210
        %s212 = smul.u32 9, %s18
      $region28: #{tpu_custom_call.1} parent=23 // pred_fallthru
        _
      // Predicated region
      $region29: #{tpu_custom_call.1} parent=23 // pred_check
        %p213 = pneg %p79
      $region30: #{tpu_custom_call.1} parent=23 // pred_check_branch
        %215 = sbr.rel (%p213) target = $region32
      $region31: #{tpu_custom_call.1} parent=23 // pred_region
        %s216 = smul.u32 8, %s18
        %p217 = scmp.lt.s32.totalorder %s17, 1
        %s218 = scalar_select %p217, %s17, 1
        %p219 = scmp.lt.s32.totalorder %s216, 7
        %s220 = scalar_select %p219, %s216, 7
        %s221 = smul.addr %s220, 2
        %s222 = smul.addr %s218, 16
        %s223 = sadd.s32 %s221, %s222
        %s224 = smul.addr %s223, 4
        %s225 = scalar_lea.vmem %s1, %s224
        %s226 = smul.u32 8, %s18
      $region32: #{tpu_custom_call.1} parent=23 // pred_fallthru
        _
    $region24: #{tpu_custom_call.1} parent=5 // pred_fallthru
      _
    %p227 = scmp.le.s32.totalorder 1, %s10
    %p228 = scmp.lt.s32.totalorder %s10, 3
    %p229 = pnand %p227, %p228
    %p230 = pneg %p229
    // Predicated region
    $region33: #{tpu_custom_call.1} parent=5 // pred_check
      _
    $region34: #{tpu_custom_call.1} parent=5 // pred_check_branch
      %232 = sbr.rel (%p229) target = $region36
    $region35: #{tpu_custom_call.1} parent=5 // pred_region
      %s233 = ssub.s32 %s10, 1
      %s234 = smul.u32 9, %s21
      %p235 = scmp.lt.s32.totalorder %s20, 1
      %s236 = scalar_select %p235, %s20, 1
      %p237 = scmp.lt.s32.totalorder %s234, 8
      %s238 = scalar_select %p237, %s234, 8
      %s239 = smul.addr %s238, 2
      %s240 = smul.addr %s236, 18
      %s241 = sadd.s32 %s239, %s240
      %s242 = smul.addr %s241, 4
      %s243 = scalar_lea.vmem %s0, %s242
      %p244 = pneg %p57
      %p245 = pneg %p54
      %s246 = smul.u32 8, %s21
      %p247 = scmp.lt.s32.totalorder %s20, 1
      %s248 = scalar_select %p247, %s20, 1
      %p249 = scmp.lt.s32.totalorder %s246, 7
      %s250 = scalar_select %p249, %s246, 7
      %s251 = smul.addr %s250, 2
      %s252 = smul.addr %s248, 16
      %s253 = sadd.s32 %s251, %s252
      %s254 = smul.addr %s253, 4
      %s255 = scalar_lea.vmem %s1, %s254
      %p256 = pneg %p85
      %p257 = pneg %p82
      %p258 = scmp.lt.s32.totalorder %s22, 0
      %s259 = scalar_select %p258, %s22, 0
      %s260 = smul.addr %s259, 4
      %s261 = scalar_lea.vmem %s2, %s260
      %p262 = pneg %p111
      %p263 = pneg %p108
      %p264 = scmp.lt.s32.totalorder %s22, 0
      %s265 = scalar_select %p264, %s22, 0
      %s266 = scalar_lea.vmem %s3, %s265
      %p267 = pneg %p137
      %p268 = pneg %p134
      %p269 = pneg %p167
      %p270 = pneg %p164
      %s271 = smul.u32 8, %s21
      %p272 = scmp.lt.s32.totalorder %s20, 1
      %s273 = scalar_select %p272, %s20, 1
      %p274 = scmp.lt.s32.totalorder %s271, 7
      %s275 = scalar_select %p274, %s271, 7
      %p276 = scmp.lt.s32.totalorder %s22, 0
      %s277 = scalar_select %p276, %s22, 0
      %s278 = smul.addr %s275, 2
      %s279 = sadd.s32 %s277, %s278
      %s280 = smul.addr %s273, 16
      %s281 = sadd.s32 %s279, %s280
      %s282 = smul.addr %s281, 8
      %s283 = scalar_lea.vmem %s4, %s282
      %s284 = smul.u32 9, %s21
      %p285 = scmp.lt.s32.totalorder %s20, 1
      %s286 = scalar_select %p285, %s20, 1
      %p287 = scmp.lt.s32.totalorder %s284, 8
      %s288 = scalar_select %p287, %s284, 8
      %s289 = smul.addr %s288, 2
      %s290 = smul.addr %s286, 18
      %s291 = sadd.s32 %s289, %s290
      %s292 = smul.addr %s291, 4
      %s293 = scalar_lea.vmem %s0, %s292
      %s294 = smul.u32 9, %s21
      %s295 = smul.u32 8, %s21
      %p296 = scmp.lt.s32.totalorder %s20, 1
      %s297 = scalar_select %p296, %s20, 1
      %p298 = scmp.lt.s32.totalorder %s295, 7
      %s299 = scalar_select %p298, %s295, 7
      %s300 = smul.addr %s299, 2
      %s301 = smul.addr %s297, 16
      %s302 = sadd.s32 %s300, %s301
      %s303 = smul.addr %s302, 4
      %s304 = scalar_lea.vmem %s1, %s303
      %s305 = smul.u32 8, %s21
      %p306 = scmp.lt.s32.totalorder %s22, 0
      %s307 = scalar_select %p306, %s22, 0
      %s308 = smul.addr %s307, 4
      %s309 = scalar_lea.vmem %s2, %s308
      %p310 = scmp.lt.s32.totalorder %s22, 0
      %s311 = scalar_select %p310, %s22, 0
      %s312 = scalar_lea.vmem %s3, %s311
      %s313 = smul.u32 8, %s21
      %p314 = scmp.lt.s32.totalorder %s20, 1
      %s315 = scalar_select %p314, %s20, 1
      %p316 = scmp.lt.s32.totalorder %s313, 7
      %s317 = scalar_select %p316, %s313, 7
      %p318 = scmp.lt.s32.totalorder %s22, 0
      %s319 = scalar_select %p318, %s22, 0
      %s320 = smul.addr %s317, 2
      %s321 = sadd.s32 %s319, %s320
      %s322 = smul.addr %s315, 16
      %s323 = sadd.s32 %s321, %s322
      %s324 = smul.addr %s323, 8
      %s325 = scalar_lea.vmem %s4, %s324
      %s326 = smul.u32 8, %s21
      %v328 = vld [vmem:[%s293] sm:$0xf]
      %v329 = vld [vmem:[%s293 + $0x4] sm:$0xf]
      %v330 = vld [vmem:[%s293 + $0x8] sm:$0xf]
      %v331 = vld [vmem:[%s293 + $0xc] sm:$0xf]
      %v332 = vld [vmem:[%s293 + $0x10] sm:$0xf]
      %v333 = vld [vmem:[%s293 + $0x14] sm:$0xf]
      %v334 = vld [vmem:[%s293 + $0x18] sm:$0xf]
      %v335 = vld [vmem:[%s293 + $0x1c] sm:$0xf]
      %v336 = vld [vmem:[%s293 + $0x20] sm:$0xf]
      %v337 = vld [vmem:[%s293 + $0x24] sm:$0xf]
      %v338 = vld [vmem:[%s293 + $0x28] sm:$0xf]
      %v339 = vld [vmem:[%s293 + $0x2c] sm:$0xf]
      %v340 = vld [vmem:[%s293 + $0x30] sm:$0xf]
      %v341 = vld [vmem:[%s293 + $0x34] sm:$0xf]
      %v342 = vld [vmem:[%s293 + $0x38] sm:$0xf]
      %v343 = vld [vmem:[%s293 + $0x3c] sm:$0xf]
      %s344 = scalar_lea.vmem %s293, 8
      %v345 = vld [vmem:[%s344] sm:$0xf]
      %v346 = vld [vmem:[%s344 + $0x4] sm:$0xf]
      %v347 = vld [vmem:[%s344 + $0x8] sm:$0xf]
      %v348 = vld [vmem:[%s344 + $0xc] sm:$0xf]
      %v349 = vld [vmem:[%s344 + $0x10] sm:$0xf]
      %v350 = vld [vmem:[%s344 + $0x14] sm:$0xf]
      %v351 = vld [vmem:[%s344 + $0x18] sm:$0xf]
      %v352 = vld [vmem:[%s344 + $0x1c] sm:$0xf]
      %v353 = vld [vmem:[%s344 + $0x20] sm:$0xf]
      %v354 = vld [vmem:[%s344 + $0x24] sm:$0xf]
      %v355 = vld [vmem:[%s344 + $0x28] sm:$0xf]
      %v356 = vld [vmem:[%s344 + $0x2c] sm:$0xf]
      %v357 = vld [vmem:[%s344 + $0x30] sm:$0xf]
      %v358 = vld [vmem:[%s344 + $0x34] sm:$0xf]
      %v359 = vld [vmem:[%s344 + $0x38] sm:$0xf]
      %v360 = vld [vmem:[%s344 + $0x3c] sm:$0xf]
      %v361 = vld [vmem:[%s304] sm:$0xf]
      %v362 = vld [vmem:[%s304 + $0x4] sm:$0xf]
      %v363 = vld [vmem:[%s304 + $0x8] sm:$0xf]
      %v364 = vld [vmem:[%s304 + $0xc] sm:$0xf]
      %v365 = vld [vmem:[%s304 + $0x10] sm:$0xf]
      %v366 = vld [vmem:[%s304 + $0x14] sm:$0xf]
      %v367 = vld [vmem:[%s304 + $0x18] sm:$0xf]
      %v368 = vld [vmem:[%s304 + $0x1c] sm:$0xf]
      %v369 = vld [vmem:[%s304 + $0x20] sm:$0xf]
      %v370 = vld [vmem:[%s304 + $0x24] sm:$0xf]
      %v371 = vld [vmem:[%s304 + $0x28] sm:$0xf]
      %v372 = vld [vmem:[%s304 + $0x2c] sm:$0xf]
      %v373 = vld [vmem:[%s304 + $0x30] sm:$0xf]
      %v374 = vld [vmem:[%s304 + $0x34] sm:$0xf]
      %v375 = vld [vmem:[%s304 + $0x38] sm:$0xf]
      %v376 = vld [vmem:[%s304 + $0x3c] sm:$0xf]
      %v377 = vld [vmem:[%s309] sm:$0xf]
      %v378 = vld [vmem:[%s309 + $0x4] sm:$0x3]
      %s379 = scalar_lea.vmem %s309, 8
      %v380 = vld [vmem:[%s379] sm:$0xf]
      %v381 = vld [vmem:[%s379 + $0x4] sm:$0x3]
      %v398 = vunpack.c.l.b16 %v361
      %v399 = vunpack.c.l.b16 %v362
      %v400 = vunpack.c.l.b16 %v363
      %v401 = vunpack.c.l.b16 %v364
      %v402 = vunpack.c.l.b16 %v365
      %v403 = vunpack.c.l.b16 %v366
      %v404 = vunpack.c.l.b16 %v367
      %v405 = vunpack.c.l.b16 %v368
      %v406 = vunpack.c.l.b16 %v369
      %v407 = vunpack.c.l.b16 %v370
      %v408 = vunpack.c.l.b16 %v371
      %v409 = vunpack.c.l.b16 %v372
      %v410 = vunpack.c.l.b16 %v373
      %v411 = vunpack.c.l.b16 %v374
      %v412 = vunpack.c.l.b16 %v375
      %v413 = vunpack.c.l.b16 %v376
      %v414 = vpack.c.b16 %v399, %v398
      %v415 = vpack.c.b16 %v401, %v400
      %v416 = vpack.c.b16 %v403, %v402
      %v417 = vpack.c.b16 %v405, %v404
      %v418 = vpack.c.b16 %v407, %v406
      %v419 = vpack.c.b16 %v409, %v408
      %v420 = vpack.c.b16 %v411, %v410
      %v421 = vpack.c.b16 %v413, %v412
      %v424 = vunpack.c.l.b16 %v380
      %v425 = vunpack.c.l.b16 %v381
      %v426 = vpack.c.b16 %v425, %v424
      %vm427 = vcmask 97280
      %v429 = vsel %vm427, %v414, 0
      %v432 = vsel %vm427, %v415, 0
      %v435 = vsel %vm427, %v416, 0
      %v438 = vsel %vm427, %v417, 0
      %v441 = vsel %vm427, %v418, 0
      %v444 = vsel %vm427, %v419, 0
      %v447 = vsel %vm427, %v420, 0
      %v450 = vsel %vm427, %v421, 0
      %vm452 = vcmask 1045504
      %v454 = vsel %vm452, %v426, 0
      %456 = vmatprep.subr.bf16.mxu0 0
      %457 = vmatpush1.bf16.msra.mxu0 0
      %458 = vmatprep.subr.bf16.mxu0 0
      %459 = vmatpush1.bf16.msra.mxu0 0
      %460 = vmatprep.subr.bf16.mxu0 0
      %461 = vmatpush1.bf16.msra.mxu0 0
      %462 = vmatprep.subr.bf16.mxu0 0
      %463 = vmatpush1.bf16.msra.mxu0 0
      %464 = vmatprep.subr.bf16.mxu0 0
      %465 = vmatpush1.bf16.msra.mxu0 0
      %466 = vmatprep.subr.bf16.mxu0 0
      %467 = vmatpush1.bf16.msra.mxu0 0
      %468 = vmatprep.subr.bf16.mxu0 0
      %469 = vmatpush1.bf16.msra.mxu0 0
      %470 = vmatprep.subr.bf16.mxu0 0
      %471 = vmatpush1.bf16.msra.mxu0 %v454
      %472 = vmatprep.subr.bf16.mxu0 0
      %473 = vmatpush2.bf16.msra.mxu0 0
      %474 = vmatprep.subr.bf16.mxu0 0
      %475 = vmatpush2.bf16.msra.mxu0 0
      %476 = vmatprep.subr.bf16.mxu0 0
      %477 = vmatpush2.bf16.msra.mxu0 0
      %478 = vmatprep.subr.bf16.mxu0 0
      %479 = vmatpush2.bf16.msra.mxu0 0
      %480 = vmatprep.subr.bf16.mxu0 0
      %481 = vmatpush2.bf16.msra.mxu0 0
      %482 = vmatprep.subr.bf16.mxu0 0
      %483 = vmatpush2.bf16.msra.mxu0 0
      %484 = vmatprep.subr.bf16.mxu0 0
      %485 = vmatpush2.bf16.msra.mxu0 0
      %486 = vmatprep.subr.bf16.mxu0 0
      %487 = vmatpush2.bf16.msra.mxu0 0
      %488 = vmatprep.mubr.bf16.mxu0 0
      %489 = vmatmul.mubr.bf16.gmra.mxu0 %v429
      %v490 = vpop.f32.mrf.mxu0
      %v491 = vadd.f32 0.0, %v490
      %v492 = vpop.f32.mrf.mxu0
      %v493 = vpop.f32.mrf.mxu0
      %v494 = vadd.f32 0.0, %v493
      %v495 = vpop.f32.mrf.mxu0
      %496 = vmatprep.mubr.bf16.mxu0 0
      %497 = vmatmul.mubr.bf16.gmra.mxu0 %v432
      %v498 = vpop.f32.mrf.mxu0
      %v499 = vadd.f32 0.0, %v498
      %v500 = vpop.f32.mrf.mxu0
      %v501 = vpop.f32.mrf.mxu0
      %v502 = vadd.f32 0.0, %v501
      %v503 = vpop.f32.mrf.mxu0
      %504 = vmatprep.mubr.bf16.mxu0 0
      %505 = vmatmul.mubr.bf16.gmra.mxu0 %v435
      %v506 = vpop.f32.mrf.mxu0
      %v507 = vadd.f32 0.0, %v506
      %v508 = vpop.f32.mrf.mxu0
      %v509 = vpop.f32.mrf.mxu0
      %v510 = vadd.f32 0.0, %v509
      %v511 = vpop.f32.mrf.mxu0
      %512 = vmatprep.mubr.bf16.mxu0 0
      %513 = vmatmul.mubr.bf16.gmra.mxu0 %v438
      %v514 = vpop.f32.mrf.mxu0
      %v515 = vadd.f32 0.0, %v514
      %v516 = vpop.f32.mrf.mxu0
      %v517 = vpop.f32.mrf.mxu0
      %v518 = vadd.f32 0.0, %v517
      %v519 = vpop.f32.mrf.mxu0
      %520 = vmatprep.mubr.bf16.mxu0 0
      %521 = vmatmul.mubr.bf16.gmra.mxu0 %v441
      %v522 = vpop.f32.mrf.mxu0
      %v523 = vadd.f32 0.0, %v522
      %v524 = vpop.f32.mrf.mxu0
      %v525 = vpop.f32.mrf.mxu0
      %v526 = vadd.f32 0.0, %v525
      %v527 = vpop.f32.mrf.mxu0
      %528 = vmatprep.mubr.bf16.mxu0 0
      %529 = vmatmul.mubr.bf16.gmra.mxu0 %v444
      %v530 = vpop.f32.mrf.mxu0
      %v531 = vadd.f32 0.0, %v530
      %v532 = vpop.f32.mrf.mxu0
      %v533 = vpop.f32.mrf.mxu0
      %v534 = vadd.f32 0.0, %v533
      %v535 = vpop.f32.mrf.mxu0
      %536 = vmatprep.mubr.bf16.mxu0 0
      %537 = vmatmul.mubr.bf16.gmra.mxu0 %v447
      %v538 = vpop.f32.mrf.mxu0
      %v539 = vadd.f32 0.0, %v538
      %v540 = vpop.f32.mrf.mxu0
      %v541 = vpop.f32.mrf.mxu0
      %v542 = vadd.f32 0.0, %v541
      %v543 = vpop.f32.mrf.mxu0
      %544 = vmatprep.mubr.bf16.mxu0 0
      %545 = vmatmul.mubr.bf16.gmra.mxu0 %v450
      %v546 = vpop.f32.mrf.mxu0
      %v547 = vadd.f32 0.0, %v546
      %v548 = vpop.f32.mrf.mxu0
      %v549 = vpop.f32.mrf.mxu0
      %v550 = vadd.f32 0.0, %v549
      %v551 = vpop.f32.mrf.mxu0
      %552 = vdwg.mxu0
      %v569 = vunpack.c.l.b16 %v328
      %v570 = vunpack.c.l.b16 %v329
      %v571 = vunpack.c.l.b16 %v330
      %v572 = vunpack.c.l.b16 %v331
      %v573 = vunpack.c.l.b16 %v332
      %v574 = vunpack.c.l.b16 %v333
      %v575 = vunpack.c.l.b16 %v334
      %v576 = vunpack.c.l.b16 %v335
      %v577 = vunpack.c.l.b16 %v336
      %v578 = vunpack.c.l.b16 %v337
      %v579 = vunpack.c.l.b16 %v338
      %v580 = vunpack.c.l.b16 %v339
      %v581 = vunpack.c.l.b16 %v340
      %v582 = vunpack.c.l.b16 %v341
      %v583 = vunpack.c.l.b16 %v342
      %v584 = vunpack.c.l.b16 %v343
      %v585 = vpack.c.b16 %v570, %v569
      %v586 = vpack.c.b16 %v572, %v571
      %v587 = vpack.c.b16 %v574, %v573
      %v588 = vpack.c.b16 %v576, %v575
      %v589 = vpack.c.b16 %v578, %v577
      %v590 = vpack.c.b16 %v580, %v579
      %v591 = vpack.c.b16 %v582, %v581
      %v592 = vpack.c.b16 %v584, %v583
      %v595 = vunpack.c.l.b16 %v377
      %v596 = vunpack.c.l.b16 %v378
      %v597 = vpack.c.b16 %v596, %v595
      %v599 = vsel %vm427, %v585, 0
      %v602 = vsel %vm427, %v586, 0
      %v605 = vsel %vm427, %v587, 0
      %v608 = vsel %vm427, %v588, 0
      %v611 = vsel %vm427, %v589, 0
      %v614 = vsel %vm427, %v590, 0
      %v617 = vsel %vm427, %v591, 0
      %v620 = vsel %vm427, %v592, 0
      %v623 = vsel %vm452, %v597, 0
      %625 = vmatprep.subr.bf16.mxu0 0
      %626 = vmatpush1.bf16.msra.mxu0 0
      %627 = vmatprep.subr.bf16.mxu0 0
      %628 = vmatpush1.bf16.msra.mxu0 0
      %629 = vmatprep.subr.bf16.mxu0 0
      %630 = vmatpush1.bf16.msra.mxu0 0
      %631 = vmatprep.subr.bf16.mxu0 0
      %632 = vmatpush1.bf16.msra.mxu0 0
      %633 = vmatprep.subr.bf16.mxu0 0
      %634 = vmatpush1.bf16.msra.mxu0 0
      %635 = vmatprep.subr.bf16.mxu0 0
      %636 = vmatpush1.bf16.msra.mxu0 0
      %637 = vmatprep.subr.bf16.mxu0 0
      %638 = vmatpush1.bf16.msra.mxu0 0
      %639 = vmatprep.subr.bf16.mxu0 0
      %640 = vmatpush1.bf16.msra.mxu0 %v623
      %641 = vmatprep.subr.bf16.mxu0 0
      %642 = vmatpush2.bf16.msra.mxu0 0
      %643 = vmatprep.subr.bf16.mxu0 0
      %644 = vmatpush2.bf16.msra.mxu0 0
      %645 = vmatprep.subr.bf16.mxu0 0
      %646 = vmatpush2.bf16.msra.mxu0 0
      %647 = vmatprep.subr.bf16.mxu0 0
      %648 = vmatpush2.bf16.msra.mxu0 0
      %649 = vmatprep.subr.bf16.mxu0 0
      %650 = vmatpush2.bf16.msra.mxu0 0
      %651 = vmatprep.subr.bf16.mxu0 0
      %652 = vmatpush2.bf16.msra.mxu0 0
      %653 = vmatprep.subr.bf16.mxu0 0
      %654 = vmatpush2.bf16.msra.mxu0 0
      %655 = vmatprep.subr.bf16.mxu0 0
      %656 = vmatpush2.bf16.msra.mxu0 0
      %657 = vmatprep.mubr.bf16.mxu0 0
      %658 = vmatmul.mubr.bf16.gmra.mxu0 %v599
      %v659 = vpop.f32.mrf.mxu0
      %v660 = vadd.f32 %v491, %v659
      %v661 = vpop.f32.mrf.mxu0
      %v662 = vpop.f32.mrf.mxu0
      %v663 = vadd.f32 %v494, %v662
      %v664 = vpop.f32.mrf.mxu0
      %665 = vmatprep.mubr.bf16.mxu0 0
      %666 = vmatmul.mubr.bf16.gmra.mxu0 %v602
      %v667 = vpop.f32.mrf.mxu0
      %v668 = vadd.f32 %v499, %v667
      %v669 = vpop.f32.mrf.mxu0
      %v670 = vpop.f32.mrf.mxu0
      %v671 = vadd.f32 %v502, %v670
      %v672 = vpop.f32.mrf.mxu0
      %673 = vmatprep.mubr.bf16.mxu0 0
      %674 = vmatmul.mubr.bf16.gmra.mxu0 %v605
      %v675 = vpop.f32.mrf.mxu0
      %v676 = vadd.f32 %v507, %v675
      %v677 = vpop.f32.mrf.mxu0
      %v678 = vpop.f32.mrf.mxu0
      %v679 = vadd.f32 %v510, %v678
      %v680 = vpop.f32.mrf.mxu0
      %681 = vmatprep.mubr.bf16.mxu0 0
      %682 = vmatmul.mubr.bf16.gmra.mxu0 %v608
      %v683 = vpop.f32.mrf.mxu0
      %v684 = vadd.f32 %v515, %v683
      %v685 = vpop.f32.mrf.mxu0
      %v686 = vpop.f32.mrf.mxu0
      %v687 = vadd.f32 %v518, %v686
      %v688 = vpop.f32.mrf.mxu0
      %689 = vmatprep.mubr.bf16.mxu0 0
      %690 = vmatmul.mubr.bf16.gmra.mxu0 %v611
      %v691 = vpop.f32.mrf.mxu0
      %v692 = vadd.f32 %v523, %v691
      %v693 = vpop.f32.mrf.mxu0
      %v694 = vpop.f32.mrf.mxu0
      %v695 = vadd.f32 %v526, %v694
      %v696 = vpop.f32.mrf.mxu0
      %697 = vmatprep.mubr.bf16.mxu0 0
      %698 = vmatmul.mubr.bf16.gmra.mxu0 %v614
      %v699 = vpop.f32.mrf.mxu0
      %v700 = vadd.f32 %v531, %v699
      %v701 = vpop.f32.mrf.mxu0
      %v702 = vpop.f32.mrf.mxu0
      %v703 = vadd.f32 %v534, %v702
      %v704 = vpop.f32.mrf.mxu0
      %705 = vmatprep.mubr.bf16.mxu0 0
      %706 = vmatmul.mubr.bf16.gmra.mxu0 %v617
      %v707 = vpop.f32.mrf.mxu0
      %v708 = vadd.f32 %v539, %v707
      %v709 = vpop.f32.mrf.mxu0
      %v710 = vpop.f32.mrf.mxu0
      %v711 = vadd.f32 %v542, %v710
      %v712 = vpop.f32.mrf.mxu0
      %713 = vmatprep.mubr.bf16.mxu0 0
      %714 = vmatmul.mubr.bf16.gmra.mxu0 %v620
      %v715 = vpop.f32.mrf.mxu0
      %v716 = vadd.f32 %v547, %v715
      %v717 = vpop.f32.mrf.mxu0
      %v718 = vpop.f32.mrf.mxu0
      %v719 = vadd.f32 %v550, %v718
      %v720 = vpop.f32.mrf.mxu0
      %721 = vdwg.mxu0
      %s722 = scalar_lea.vmem %s309, 16
      %v723 = vld [vmem:[%s722] sm:$0xf]
      %v724 = vld [vmem:[%s722 + $0x4] sm:$0x3]
      %v741 = vunpack.c.l.b16 %v345
      %v742 = vunpack.c.l.b16 %v346
      %v743 = vunpack.c.l.b16 %v347
      %v744 = vunpack.c.l.b16 %v348
      %v745 = vunpack.c.l.b16 %v349
      %v746 = vunpack.c.l.b16 %v350
      %v747 = vunpack.c.l.b16 %v351
      %v748 = vunpack.c.l.b16 %v352
      %v749 = vunpack.c.l.b16 %v353
      %v750 = vunpack.c.l.b16 %v354
      %v751 = vunpack.c.l.b16 %v355
      %v752 = vunpack.c.l.b16 %v356
      %v753 = vunpack.c.l.b16 %v357
      %v754 = vunpack.c.l.b16 %v358
      %v755 = vunpack.c.l.b16 %v359
      %v756 = vunpack.c.l.b16 %v360
      %v757 = vpack.c.b16 %v742, %v741
      %v758 = vpack.c.b16 %v744, %v743
      %v759 = vpack.c.b16 %v746, %v745
      %v760 = vpack.c.b16 %v748, %v747
      %v761 = vpack.c.b16 %v750, %v749
      %v762 = vpack.c.b16 %v752, %v751
      %v763 = vpack.c.b16 %v754, %v753
      %v764 = vpack.c.b16 %v756, %v755
      %v767 = vunpack.c.l.b16 %v723
      %v768 = vunpack.c.l.b16 %v724
      %v769 = vpack.c.b16 %v768, %v767
      %v771 = vsel %vm427, %v757, 0
      %v774 = vsel %vm427, %v758, 0
      %v777 = vsel %vm427, %v759, 0
      %v780 = vsel %vm427, %v760, 0
      %v783 = vsel %vm427, %v761, 0
      %v786 = vsel %vm427, %v762, 0
      %v789 = vsel %vm427, %v763, 0
      %v792 = vsel %vm427, %v764, 0
      %v795 = vsel %vm452, %v769, 0
      %797 = vmatprep.subr.bf16.mxu0 0
      %798 = vmatpush1.bf16.msra.mxu0 0
      %799 = vmatprep.subr.bf16.mxu0 0
      %800 = vmatpush1.bf16.msra.mxu0 0
      %801 = vmatprep.subr.bf16.mxu0 0
      %802 = vmatpush1.bf16.msra.mxu0 0
      %803 = vmatprep.subr.bf16.mxu0 0
      %804 = vmatpush1.bf16.msra.mxu0 0
      %805 = vmatprep.subr.bf16.mxu0 0
      %806 = vmatpush1.bf16.msra.mxu0 0
      %807 = vmatprep.subr.bf16.mxu0 0
      %808 = vmatpush1.bf16.msra.mxu0 0
      %809 = vmatprep.subr.bf16.mxu0 0
      %810 = vmatpush1.bf16.msra.mxu0 0
      %811 = vmatprep.subr.bf16.mxu0 0
      %812 = vmatpush1.bf16.msra.mxu0 %v795
      %813 = vmatprep.subr.bf16.mxu0 0
      %814 = vmatpush2.bf16.msra.mxu0 0
      %815 = vmatprep.subr.bf16.mxu0 0
      %816 = vmatpush2.bf16.msra.mxu0 0
      %817 = vmatprep.subr.bf16.mxu0 0
      %818 = vmatpush2.bf16.msra.mxu0 0
      %819 = vmatprep.subr.bf16.mxu0 0
      %820 = vmatpush2.bf16.msra.mxu0 0
      %821 = vmatprep.subr.bf16.mxu0 0
      %822 = vmatpush2.bf16.msra.mxu0 0
      %823 = vmatprep.subr.bf16.mxu0 0
      %824 = vmatpush2.bf16.msra.mxu0 0
      %825 = vmatprep.subr.bf16.mxu0 0
      %826 = vmatpush2.bf16.msra.mxu0 0
      %827 = vmatprep.subr.bf16.mxu0 0
      %828 = vmatpush2.bf16.msra.mxu0 0
      %829 = vmatprep.mubr.bf16.mxu0 0
      %830 = vmatmul.mubr.bf16.gmra.mxu0 %v771
      %v831 = vpop.f32.mrf.mxu0
      %v832 = vadd.f32 0.0, %v831
      %v833 = vpop.f32.mrf.mxu0
      %v834 = vpop.f32.mrf.mxu0
      %v835 = vadd.f32 0.0, %v834
      %v836 = vpop.f32.mrf.mxu0
      %837 = vmatprep.mubr.bf16.mxu0 0
      %838 = vmatmul.mubr.bf16.gmra.mxu0 %v774
      %v839 = vpop.f32.mrf.mxu0
      %v840 = vadd.f32 0.0, %v839
      %v841 = vpop.f32.mrf.mxu0
      %v842 = vpop.f32.mrf.mxu0
      %v843 = vadd.f32 0.0, %v842
      %v844 = vpop.f32.mrf.mxu0
      %845 = vmatprep.mubr.bf16.mxu0 0
      %846 = vmatmul.mubr.bf16.gmra.mxu0 %v777
      %v847 = vpop.f32.mrf.mxu0
      %v848 = vadd.f32 0.0, %v847
      %v849 = vpop.f32.mrf.mxu0
      %v850 = vpop.f32.mrf.mxu0
      %v851 = vadd.f32 0.0, %v850
      %v852 = vpop.f32.mrf.mxu0
      %853 = vmatprep.mubr.bf16.mxu0 0
      %854 = vmatmul.mubr.bf16.gmra.mxu0 %v780
      %v855 = vpop.f32.mrf.mxu0
      %v856 = vadd.f32 0.0, %v855
      %v857 = vpop.f32.mrf.mxu0
      %v858 = vpop.f32.mrf.mxu0
      %v859 = vadd.f32 0.0, %v858
      %v860 = vpop.f32.mrf.mxu0
      %861 = vmatprep.mubr.bf16.mxu0 0
      %862 = vmatmul.mubr.bf16.gmra.mxu0 %v783
      %v863 = vpop.f32.mrf.mxu0
      %v864 = vadd.f32 0.0, %v863
      %v865 = vpop.f32.mrf.mxu0
      %v866 = vpop.f32.mrf.mxu0
      %v867 = vadd.f32 0.0, %v866
      %v868 = vpop.f32.mrf.mxu0
      %869 = vmatprep.mubr.bf16.mxu0 0
      %870 = vmatmul.mubr.bf16.gmra.mxu0 %v786
      %v871 = vpop.f32.mrf.mxu0
      %v872 = vadd.f32 0.0, %v871
      %v873 = vpop.f32.mrf.mxu0
      %v874 = vpop.f32.mrf.mxu0
      %v875 = vadd.f32 0.0, %v874
      %v876 = vpop.f32.mrf.mxu0
      %877 = vmatprep.mubr.bf16.mxu0 0
      %878 = vmatmul.mubr.bf16.gmra.mxu0 %v789
      %v879 = vpop.f32.mrf.mxu0
      %v880 = vadd.f32 0.0, %v879
      %v881 = vpop.f32.mrf.mxu0
      %v882 = vpop.f32.mrf.mxu0
      %v883 = vadd.f32 0.0, %v882
      %v884 = vpop.f32.mrf.mxu0
      %885 = vmatprep.mubr.bf16.mxu0 0
      %886 = vmatmul.mubr.bf16.gmra.mxu0 %v792
      %v887 = vpop.f32.mrf.mxu0
      %v888 = vadd.f32 0.0, %v887
      %v889 = vpop.f32.mrf.mxu0
      %v890 = vpop.f32.mrf.mxu0
      %v891 = vadd.f32 0.0, %v890
      %v892 = vpop.f32.mrf.mxu0
      %893 = vdwg.mxu0
      %v894 = vadd.f32 %v660, %v832
      %v895 = vadd.f32 %v663, %v835
      %v896 = vadd.f32 %v668, %v840
      %v897 = vadd.f32 %v671, %v843
      %v898 = vadd.f32 %v676, %v848
      %v899 = vadd.f32 %v679, %v851
      %v900 = vadd.f32 %v684, %v856
      %v901 = vadd.f32 %v687, %v859
      %v902 = vadd.f32 %v692, %v864
      %v903 = vadd.f32 %v695, %v867
      %v904 = vadd.f32 %v700, %v872
      %v905 = vadd.f32 %v703, %v875
      %v906 = vadd.f32 %v708, %v880
      %v907 = vadd.f32 %v711, %v883
      %v908 = vadd.f32 %v716, %v888
      %v909 = vadd.f32 %v719, %v891
      %v910 = vld [vmem:[%s312] sm:$0x1]
      %v912 = vlaneseq
      %v913 = vshrl.u32 %v912, 7
      %v914 = vsub.s32 0, %v913
      %v915 = vrot.slane %v910, %v914
      %v917 = vadd.f32 %v894, %v915
      %v918 = vadd.f32 %v895, %v915
      %v919 = vadd.f32 %v896, %v915
      %v920 = vadd.f32 %v897, %v915
      %v921 = vadd.f32 %v898, %v915
      %v922 = vadd.f32 %v899, %v915
      %v923 = vadd.f32 %v900, %v915
      %v924 = vadd.f32 %v901, %v915
      %v925 = vadd.f32 %v902, %v915
      %v926 = vadd.f32 %v903, %v915
      %v927 = vadd.f32 %v904, %v915
      %v928 = vadd.f32 %v905, %v915
      %v929 = vadd.f32 %v906, %v915
      %v930 = vadd.f32 %v907, %v915
      %v931 = vadd.f32 %v908, %v915
      %v932 = vadd.f32 %v909, %v915
      %vm933 = vcmask 31744
      %934 = vst.msk [vmem:[%s325] sm:$0xff] %vm933, %v917
      %935 = vst.msk [vmem:[%s325 + $0x8] sm:$0xff] %vm933, %v918
      %936 = vst.msk [vmem:[%s325 + $0x10] sm:$0xff] %vm933, %v919
      %937 = vst.msk [vmem:[%s325 + $0x18] sm:$0xff] %vm933, %v920
      %938 = vst.msk [vmem:[%s325 + $0x20] sm:$0xff] %vm933, %v921
      %939 = vst.msk [vmem:[%s325 + $0x28] sm:$0xff] %vm933, %v922
      %940 = vst.msk [vmem:[%s325 + $0x30] sm:$0xff] %vm933, %v923
      %941 = vst.msk [vmem:[%s325 + $0x38] sm:$0xff] %vm933, %v924
      %942 = vst.msk [vmem:[%s325 + $0x40] sm:$0xff] %vm933, %v925
      %943 = vst.msk [vmem:[%s325 + $0x48] sm:$0xff] %vm933, %v926
      %944 = vst.msk [vmem:[%s325 + $0x50] sm:$0xff] %vm933, %v927
      %945 = vst.msk [vmem:[%s325 + $0x58] sm:$0xff] %vm933, %v928
      %946 = vst.msk [vmem:[%s325 + $0x60] sm:$0xff] %vm933, %v929
      %947 = vst.msk [vmem:[%s325 + $0x68] sm:$0xff] %vm933, %v930
      %948 = vst.msk [vmem:[%s325 + $0x70] sm:$0xff] %vm933, %v931
      %949 = vst.msk [vmem:[%s325 + $0x78] sm:$0xff] %vm933, %v932
      %s950 = smul.u32 8, %s21
      %p951 = scmp.lt.s32.totalorder %s20, 1
      %s952 = scalar_select %p951, %s20, 1
      %p953 = scmp.lt.s32.totalorder %s950, 7
      %s954 = scalar_select %p953, %s950, 7
      %p955 = scmp.lt.s32.totalorder %s22, 0
      %s956 = scalar_select %p955, %s22, 0
      %s957 = smul.addr %s954, 2
      %s958 = sadd.s32 %s956, %s957
      %s959 = smul.addr %s952, 16
      %s960 = sadd.s32 %s958, %s959
      %s961 = smul.addr %s960, 8
      %s962 = scalar_lea.vmem %s4, %s961
      // Predicated region
      $region37: #{tpu_custom_call.1} parent=35 // pred_check
        %p963 = pneg %p164
      $region38: #{tpu_custom_call.1} parent=35 // pred_check_branch
        %965 = sbr.rel (%p963) target = $region40
      $region39: #{tpu_custom_call.1} parent=35 // pred_region
        %s966 = smul.u32 8, %s21
      $region40: #{tpu_custom_call.1} parent=35 // pred_fallthru
        _
    $region36: #{tpu_custom_call.1} parent=5 // pred_fallthru
      _
    %p967 = scmp.le.s32.totalorder 2, %s10
    // Predicated region
    $region41: #{tpu_custom_call.1} parent=5 // pred_check
      %p968 = pneg %p967
    $region42: #{tpu_custom_call.1} parent=5 // pred_check_branch
      %970 = sbr.rel (%p968) target = $region44
    $region43: #{tpu_custom_call.1} parent=5 // pred_region
      %s971 = ssub.s32 %s10, 2
      // Predicated region
      $region45: #{tpu_custom_call.1} parent=43 // pred_check
        %p972 = pneg %p170
      $region46: #{tpu_custom_call.1} parent=43 // pred_check_branch
        %974 = sbr.rel (%p972) target = $region48
      $region47: #{tpu_custom_call.1} parent=43 // pred_region
        %s975 = smul.u32 8, %s24
        %p976 = scmp.lt.s32.totalorder %s23, 1
        %s977 = scalar_select %p976, %s23, 1
        %p978 = scmp.lt.s32.totalorder %s975, 7
        %s979 = scalar_select %p978, %s975, 7
        %p980 = scmp.lt.s32.totalorder %s25, 0
        %s981 = scalar_select %p980, %s25, 0
        %s982 = smul.addr %s979, 2
        %s983 = sadd.s32 %s981, %s982
        %s984 = smul.addr %s977, 16
        %s985 = sadd.s32 %s983, %s984
        %s986 = smul.addr %s985, 8
        %s987 = scalar_lea.vmem %s4, %s986
      $region48: #{tpu_custom_call.1} parent=43 // pred_fallthru
        _
    $region44: #{tpu_custom_call.1} parent=5 // pred_fallthru
      _
  $region6: #{tpu_custom_call.1} parent=0 // loop_footer
    %s14 = sadd.s32 1, %s10
  $region7: #{tpu_custom_call.1} parent=0 // loop_footer_branch
    %9 = sbr.rel target = $region3
  $region8: #{tpu_custom_call.1} parent=0 // loop_exit
    _

</llo_original>
